<compile_context>
chip_gen: v6e
topology: v6e:2x2x1
jax: 0.10.0
libtpu: 0.0.40
codegen_flags: <defaults>
</compile_context>

<pallas_src>
import functools

import jax
import jax.numpy as jnp
from jax.experimental import pallas as pl
from jax.experimental.pallas import tpu as pltpu

_LANE = 128


def _round_up(x, m):
    return ((x + m - 1) // m) * m


def _head_kernel(x_ref, w1_ref, b1_ref, w2_ref, b2_ref, o_ref, *, n_sub, sub_m):
    # x_ref : (TM, D)     w1_ref: (D, Hp)     b1_ref: (1, Hp)  [f32]
    # w2_ref: (Hp, Cp)    b2_ref: (1, Cp) f32 o_ref : (TM, Cp)
    w1 = w1_ref[...]
    w2 = w2_ref[...]
    b1 = b1_ref[...]          # already f32
    b2 = b2_ref[...]          # already f32

    # Row sub-tiles emitted back-to-back: the LLO scheduler overlaps the MXU
    # matmul #1 of sub-tile k+1 with the bias+tanh+cast+matmul #2 of
    # sub-tile k, hiding the VPU/EUP phase under the MXU.
    for k in range(n_sub):
        rows = pl.ds(k * sub_m, sub_m)
        h = jnp.dot(x_ref[rows, :], w1, preferred_element_type=jnp.float32)
        h = jnp.tanh(h + b1)
        if w2.dtype != jnp.float32:
            h = h.astype(w2.dtype)          # keep matmul #2 at native MXU rate
        o = jnp.dot(h, w2, preferred_element_type=jnp.float32)
        o_ref[rows, :] = (o + b2).astype(o_ref.dtype)


def _resident_spec(shape):
    """BlockSpec for a grid-invariant (weight/bias) operand: single-buffered."""
    n = len(shape)
    index_map = lambda i: (0,) * n
    try:
        return pl.BlockSpec(shape, index_map, pipeline_mode=pl.Buffered(1))
    except (TypeError, AttributeError):  # older jax without pipeline_mode
        return pl.BlockSpec(shape, index_map)


def sequence_tagging_label_head(features, w1, b1, w2, b2, *, tile_m=None,
                                compute_dtype=None, out_dtype=None):
    """Fused dense -> tanh -> out_proj.  features: (B, T, D_in) -> (B, T, C).

    Dropout layers are identity at inference.
    compute_dtype=jnp.bfloat16 casts x/w1/w2 once in the wrapper for
    MXU-native throughput (f32 accumulation kept).
    # TODO(synk): training-mode dropout (pooler_dropout > 0) not implemented.
    """
    B, T, D_in = features.shape
    H = w1.shape[1]
    C = w2.shape[1]
    M = B * T
    out_dtype = jnp.dtype(features.dtype if out_dtype is None else out_dtype)

    # Enforce one consistent compute dtype (no silent mixed-dtype promotion).
    if compute_dtype is None:
        compute_dtype = jnp.result_type(features.dtype, w1.dtype, w2.dtype)
    compute_dtype = jnp.dtype(compute_dtype)

    # Lane-pad only the weight output dims (exact: zero w1 columns give
    # tanh(0)=0 rows that meet zero w2 rows; zero w2 columns are sliced off).
    # The contraction dim D_in and the row axis M are NOT padded, so the
    # activations are never copied through HBM before the kernel.
    H_pad = _round_up(H, _LANE)
    if H_pad > _LANE and H_pad % 256 == _LANE:
        H_pad = _round_up(H_pad, 256)       # full-width MXU passes (v6e/v7x)
    C_pad = _round_up(C, _LANE)

    x2d = features.reshape(M, D_in).astype(compute_dtype)
    w1p = jnp.pad(w1.astype(compute_dtype), ((0, 0), (0, H_pad - H)))
    w2p = jnp.pad(w2.astype(compute_dtype), ((0, H_pad - H), (0, C_pad - C)))
    b1p = jnp.pad(jnp.reshape(b1, (1, H)).astype(jnp.float32),
                  ((0, 0), (0, H_pad - H)))
    b2p = jnp.pad(jnp.reshape(b2, (1, C)).astype(jnp.float32),
                  ((0, 0), (0, C_pad - C)))

    isz = jnp.dtype(compute_dtype).itemsize
    osz = jnp.dtype(out_dtype).itemsize
    row_quantum = max(8, 32 // isz)         # sublane packing of the row axis

    weight_bytes = (D_in * H_pad + H_pad * C_pad) * isz + (H_pad + C_pad) * 4
    per_row = (2 * D_in * isz               # double-buffered x tile
               + 2 * C_pad * osz            # double-buffered out tile
               + H_pad * 4                  # f32 intermediate h
               + H_pad * isz                # cast h for matmul #2
               + C_pad * 4)                 # f32 o before cast

    if tile_m is None:
        # VMEM budget derived against the smallest per-TC VMEM (v7x: 64 MiB).
        budget = 40 << 20
        cap = max(row_quantum, (budget - weight_bytes) // max(per_row, 1))
        tile_m = int(min(1024, cap, _round_up(M, row_quantum)))
        tile_m = max(row_quantum, (tile_m // row_quantum) * row_quantum)
        # Keep the grid >= 2 when there is enough work so both v7x
        # TensorCores get a share of the 'parallel' row axis.
        if M > row_quantum and pl.cdiv(M, tile_m) < 2:
            tile_m = max(row_quantum, _round_up(pl.cdiv(M, 2), row_quantum))
    tile_m = max(row_quantum, _round_up(int(tile_m), row_quantum))

    # Row sub-tiles inside the body (MXU vs VPU/EUP overlap).
    n_sub = 1
    for cand in (4, 2):
        if tile_m % (cand * row_quantum) == 0:
            n_sub = cand
            break
    sub_m = tile_m // n_sub

    grid = (pl.cdiv(M, tile_m),)

    need = (2 * tile_m * D_in * isz
            + 2 * tile_m * C_pad * osz
            + weight_bytes
            + 2 * sub_m * (H_pad * 4 + H_pad * isz + C_pad * 4))
    # 48 MiB cap keeps headroom for compiler scratch on v7x (64 MiB VMEM/TC).
    vmem_limit = int(min(max(int(1.5 * need), 32 << 20), 48 << 20))

    cost = pl.CostEstimate(
        flops=2 * M * D_in * H_pad + 2 * M * H_pad * C_pad,
        transcendentals=M * H_pad,
        bytes_accessed=(M * D_in * isz + M * C_pad * osz + weight_bytes),
    )

    out2d = pl.pallas_call(
        functools.partial(_head_kernel, n_sub=n_sub, sub_m=sub_m),
        out_shape=jax.ShapeDtypeStruct((M, C_pad), out_dtype),
        grid_spec=pltpu.PrefetchScalarGridSpec(
            num_scalar_prefetch=0,
            grid=grid,
            in_specs=[
                # last dim == full array dim (D_in) -> legal even when not
                # 128-aligned; partial last row-block is clipped by Pallas.
                pl.BlockSpec((tile_m, D_in), lambda i: (i, 0)),
                _resident_spec((D_in, H_pad)),
                _resident_spec((1, H_pad)),
                _resident_spec((H_pad, C_pad)),
                _resident_spec((1, C_pad)),
            ],
            out_specs=pl.BlockSpec((tile_m, C_pad), lambda i: (i, 0)),
        ),
        compiler_params=pltpu.CompilerParams(
            dimension_semantics=("parallel",),
            vmem_limit_bytes=vmem_limit),
        cost_estimate=cost,
    )(x2d, w1p, b1p, w2p, b2p)

    # Only the class-column slice remains (no row padding was introduced).
    return out2d[:, :C].reshape(B, T, C)


def _init_linear(key, fan_in, fan_out, dtype=jnp.float32):
    # torch.nn.Linear default init: U(-1/sqrt(fan_in), 1/sqrt(fan_in))
    kw, kb = jax.random.split(key)
    bound = fan_in ** -0.5
    w = jax.random.uniform(kw, (fan_in, fan_out), dtype, -bound, bound)
    b = jax.random.uniform(kb, (1, fan_out), dtype, -bound, bound)
    return w, b


def _reference(features, w1, b1, w2, b2):
    B, T, D = features.shape
    h = jnp.tanh(features.reshape(-1, D) @ w1 + b1)
    return (h @ w2 + b2).reshape(B, T, -1)


if __name__ == "__main__":
    key = jax.random.PRNGKey(0)
    k_x, k_l1, k_l2, k_x2 = jax.random.split(key, 4)

    # Small shapes consistent with the module's forward.
    B, T = 2, 8
    input_dim, inner_dim, num_classes = 32, 32, 8

    features = jax.random.normal(k_x, (B, T, input_dim), jnp.float32)
    w1, b1 = _init_linear(k_l1, input_dim, inner_dim)
    w2, b2 = _init_linear(k_l2, inner_dim, num_classes)

    # f32 path, default tiling heuristic (grid >= 2, no activation padding).
    logits = sequence_tagging_label_head(features, w1, b1, w2, b2)
    jax.block_until_ready(logits)
    ref = _reference(features, w1, b1, w2, b2)
    assert logits.shape == (B, T, num_classes)
    assert jnp.allclose(logits, ref, atol=1e-5, rtol=1e-5)

    # Ragged row count (M not a multiple of tile_m) exercises the clipped
    # partial last block (no wrapper-side row padding any more).
    feats2 = jax.random.normal(k_x2, (3, 5, input_dim), jnp.float32)
    logits2 = sequence_tagging_label_head(feats2, w1, b1, w2, b2, tile_m=8)
    jax.block_until_ready(logits2)
    ref2 = _reference(feats2, w1, b1, w2, b2)
    assert logits2.shape == (3, 5, num_classes)
    assert jnp.allclose(logits2, ref2, atol=1e-5, rtol=1e-5)

    # bf16 compute path (MXU-native rate); loose tolerance vs. f32 reference.
    logits_bf16 = sequence_tagging_label_head(
        features, w1, b1, w2, b2, compute_dtype=jnp.bfloat16)
    jax.block_until_ready(logits_bf16)
    assert logits_bf16.shape == (B, T, num_classes)
    assert jnp.allclose(logits_bf16.astype(jnp.float32), ref,
                        atol=6e-2, rtol=6e-2)

    print("KERNEL_OK")
</pallas_src>

<mosaic_0001>
module attributes {stable_mosaic.version = 11 : i64} {
  func.func @_head_kernel(%arg0: i32, %arg1: memref<8x32xf32, #tpu.memory_space<vmem>>, %arg2: memref<32x128xf32, #tpu.memory_space<vmem>>, %arg3: memref<1x128xf32, #tpu.memory_space<vmem>>, %arg4: memref<128x128xf32, #tpu.memory_space<vmem>>, %arg5: memref<1x128xf32, #tpu.memory_space<vmem>>, %arg6: memref<8x128xf32, #tpu.memory_space<vmem>>) attributes {dimension_semantics = [#tpu.dimension_semantics<parallel>], iteration_bounds = array<i64: 2>, scalar_prefetch = 0 : i64, scratch_operands = 0 : i64, tpu.core_type = #tpu.core_type<tc>, window_params = [{transform_indices = @transform_0, window_bounds = array<i64: 8, 32>}, {pipeline_mode = #tpu.pipeline_mode<synchronous>, transform_indices = @transform_1, window_bounds = array<i64: 32, 128>}, {pipeline_mode = #tpu.pipeline_mode<synchronous>, transform_indices = @transform_2, window_bounds = array<i64: 1, 128>}, {pipeline_mode = #tpu.pipeline_mode<synchronous>, transform_indices = @transform_3, window_bounds = array<i64: 128, 128>}, {pipeline_mode = #tpu.pipeline_mode<synchronous>, transform_indices = @transform_4, window_bounds = array<i64: 1, 128>}, {transform_indices = @transform_5, window_bounds = array<i64: 8, 128>}]} {
    %c0 = arith.constant 0 : index
    %c0_0 = arith.constant 0 : index
    %0 = vector.load %arg2[%c0, %c0_0] : memref<32x128xf32, #tpu.memory_space<vmem>>, vector<32x128xf32>
    %c0_1 = arith.constant 0 : index
    %c0_2 = arith.constant 0 : index
    %1 = vector.load %arg4[%c0_1, %c0_2] : memref<128x128xf32, #tpu.memory_space<vmem>>, vector<128x128xf32>
    %c0_3 = arith.constant 0 : index
    %c0_4 = arith.constant 0 : index
    %2 = vector.load %arg3[%c0_3, %c0_4] : memref<1x128xf32, #tpu.memory_space<vmem>>, vector<1x128xf32>
    %c0_5 = arith.constant 0 : index
    %c0_6 = arith.constant 0 : index
    %3 = vector.load %arg5[%c0_5, %c0_6] : memref<1x128xf32, #tpu.memory_space<vmem>>, vector<1x128xf32>
    %c0_7 = arith.constant 0 : index
    %c0_8 = arith.constant 0 : index
    %4 = vector.load %arg1[%c0_7, %c0_8] : memref<8x32xf32, #tpu.memory_space<vmem>>, vector<8x32xf32>
    %cst = arith.constant dense<0.000000e+00> : vector<8x128xf32>
    %5 = tpu.matmul %4, %0, %cst {dimension_numbers = #tpu.dot_dimension_numbers<[1], [0], [0], [1], [0, 0, 1, 1], [], []>} : vector<8x32xf32>, vector<32x128xf32>, vector<8x128xf32> -> vector<8x128xf32>
    %6 = vector.broadcast %2 : vector<1x128xf32> to vector<8x128xf32>
    %7 = arith.addf %5, %6 : vector<8x128xf32>
    %8 = math.tanh %7 : vector<8x128xf32>
    %cst_9 = arith.constant dense<0.000000e+00> : vector<8x128xf32>
    %9 = tpu.matmul %8, %1, %cst_9 {dimension_numbers = #tpu.dot_dimension_numbers<[1], [0], [0], [1], [0, 0, 1, 1], [], []>} : vector<8x128xf32>, vector<128x128xf32>, vector<8x128xf32> -> vector<8x128xf32>
    %10 = vector.broadcast %3 : vector<1x128xf32> to vector<8x128xf32>
    %11 = arith.addf %9, %10 : vector<8x128xf32>
    %c0_10 = arith.constant 0 : index
    %c0_11 = arith.constant 0 : index
    %12 = vector.load %arg6[%c0_10, %c0_11] : memref<8x128xf32, #tpu.memory_space<vmem>>, vector<8x128xf32>
    tpu.vector_store %arg6[%c0_10, %c0_11], %11 {strides = array<i32>} : memref<8x128xf32, #tpu.memory_space<vmem>>, vector<8x128xf32>,
    return
  }
  func.func @transform_0(%arg0: i32) -> (i32, i32) {
    %c0_i32 = arith.constant 0 : i32
    %c0_i32_0 = arith.constant 0 : i32
    return %arg0, %c0_i32 : i32, i32
  }
  func.func @transform_1(%arg0: i32) -> (i32, i32) {
    %c0_i32 = arith.constant 0 : i32
    %c0_i32_0 = arith.constant 0 : i32
    %c0_i32_1 = arith.constant 0 : i32
    return %c0_i32, %c0_i32_0 : i32, i32
  }
  func.func @transform_2(%arg0: i32) -> (i32, i32) {
    %c0_i32 = arith.constant 0 : i32
    %c0_i32_0 = arith.constant 0 : i32
    %c0_i32_1 = arith.constant 0 : i32
    return %c0_i32, %c0_i32_0 : i32, i32
  }
  func.func @transform_3(%arg0: i32) -> (i32, i32) {
    %c0_i32 = arith.constant 0 : i32
    %c0_i32_0 = arith.constant 0 : i32
    %c0_i32_1 = arith.constant 0 : i32
    return %c0_i32, %c0_i32_0 : i32, i32
  }
  func.func @transform_4(%arg0: i32) -> (i32, i32) {
    %c0_i32 = arith.constant 0 : i32
    %c0_i32_0 = arith.constant 0 : i32
    %c0_i32_1 = arith.constant 0 : i32
    return %c0_i32, %c0_i32_0 : i32, i32
  }
  func.func @transform_5(%arg0: i32) -> (i32, i32) {
    %c0_i32 = arith.constant 0 : i32
    %c0_i32_0 = arith.constant 0 : i32
    return %arg0, %c0_i32 : i32, i32
  }
}

</mosaic_0001>

<llo_original>
// kernel: tpu_custom_call.1
$region0: #{tpu_custom_call.1}
  #allocation0 [shape = 'u32[]', space=smem, size = 0x4, offset = 0x4, fixed_abs, tag = 'smem constant byte address 0x4 - core index']
  #allocation1 [shape = 'u32[144,128]{1,0:T(1,128)}', space=vmem, size = 0x12000, scoped, tag = 'internal scratch']
  %s0 = inlined_call_operand.hbm [shape: f32[16,32], index: 0, kind: input, shape index: {}]
  %s1 = inlined_call_operand.hbm [shape: f32[32,128], index: 1, kind: input, shape index: {}]
  %s2 = inlined_call_operand.vmem [shape: f32[1,128], index: 2, kind: input, shape index: {}]
  %s3 = inlined_call_operand.hbm [shape: f32[128,128], index: 3, kind: input, shape index: {}]
  %s4 = inlined_call_operand.vmem [shape: f32[1,128], index: 4, kind: input, shape index: {}]
  %s5 = inlined_call_operand.hbm [shape: f32[16,128], index: 5, kind: output, shape index: {}]
  %s6 = sld [smem:[#allocation0]]
  $region65: #{tpu_custom_call.1} parent=0
    _
  %s8 = ssub.s32 1, %s6
  %s9 = scalar_select 0, %s8, %s6
  $region1: #{tpu_custom_call.1} parent=0
    #allocation2 [shape = 'u8[8192]{0}', space=vmem, size = 0x2000, scoped, tag = 'input window, operand 0']
    #allocation3 [shape = 's32[2]{0}', space=sflag, size = 0x8, scoped, tag = 'scoped memory for tpu_custom_call.1']
    #allocation4 [shape = 's32[2]{0}', space=sflag, size = 0x8, scoped, tag = 'scoped memory for tpu_custom_call.1']
    #allocation5 [shape = 'u8[16384]{0}', space=vmem, size = 0x4000, scoped, tag = 'input window, operand 1, single buffered']
    #allocation6 [shape = 's32[1]{0}', space=sflag, size = 0x4, scoped, tag = 'scoped memory for tpu_custom_call.1']
    #allocation7 [shape = 'u8[65536]{0}', space=vmem, size = 0x10000, scoped, tag = 'input window, operand 3, single buffered']
    #allocation8 [shape = 'u8[8192]{0}', space=vmem, size = 0x2000, scoped, tag = 'output window, operand 0']
    %10 = vsyncpa [#allocation3], 0
    %s11 = scalar_lea.sflag [#allocation3], 1
    %12 = vsyncpa %s11, 0
    %13 = vsyncpa [#allocation6], 0
    %14 = vsyncpa [#allocation4], 0
    %s15 = scalar_lea.sflag [#allocation4], 1
    %16 = vsyncpa %s15, 0
    loop: start=0, step=1, limit=4
    $region2: #{tpu_custom_call.1} parent=1 // loop_pre_header
      _
    $region3: #{tpu_custom_call.1} parent=1 // loop_header
      %s18 = sphi 0, %s22
      %p19 = scmp.ge.s32.totalorder %s18, 4
      %s28 = sphi 0, %s30
      %s31 = sphi 0, %s28
      %s32 = sphi 0, %s31
      %s48 = sphi 0, %s32
      %s52 = sphi 0, %s52
      %s54 = sphi 0, %s52
      %s55 = sphi 0, %s54
      %s69 = sphi 0, %s55
      %s73 = sphi 0, %s73
      %s75 = sphi 0, %s73
      %s76 = sphi 0, %s75
      %s90 = sphi 0, %s76
      %s94 = sphi 0, %s94
      %s96 = sphi 0, %s94
      %s97 = sphi 0, %s96
      %s111 = sphi 0, %s97
      %s115 = sphi 0, %s115
      %s117 = sphi 0, %s115
      %s118 = sphi 0, %s117
      %s132 = sphi 0, %s118
      %s138 = sphi 0, %s140
      %s141 = sphi 0, %s138
      %s142 = sphi 0, %s141
      %s158 = sphi 0, %s142
    $region4: #{tpu_custom_call.1} parent=1 // loop_header_branch
      %21 = sbr.rel (%p19) target = $region8
    $region5: #{tpu_custom_call.1} parent=1 // loop_body
      %s23 = ssub.s32 %s18, 1
      %s24 = ssub.s32 %s18, 2
      %s25 = sadd.s32 %s18, 1
      %s26 = ssub.s32 %s18, %s25
      %p27 = scmp.eq.s32.totalorder %s26, 0
      %s29 = sadd.s32 %s28, 1
      %s30 = scalar_select %p27, %s28, %s29
      %p33 = pneg %p27
      %p34 = scmp.eq.s32.totalorder %s18, 1
      %p35 = por %p33, %p34
      %p36 = scmp.ne.s32.totalorder %s28, %s31
      %p37 = scmp.eq.s32.totalorder %s18, 0
      %p38 = por %p36, %p37
      %p39 = scmp.ne.s32.totalorder %s28, %s31
      %p40 = scmp.eq.s32.totalorder %s23, 1
      %p41 = por %p39, %p40
      %p42 = scmp.ne.s32.totalorder %s31, %s32
      %p43 = scmp.eq.s32.totalorder %s23, 0
      %p44 = por %p42, %p43
      %p45 = scmp.ne.s32.totalorder %s31, %s32
      %p46 = scmp.eq.s32.totalorder %s24, 1
      %p47 = por %p45, %p46
      %p49 = scmp.ne.s32.totalorder %s32, %s48
      %p50 = scmp.eq.s32.totalorder %s24, 0
      %p51 = por %p49, %p50
      %s53 = sadd.s32 %s52, 1
      %p56 = scmp.eq.s32.totalorder %s18, 1
      %p57 = scmp.ne.s32.totalorder %s52, %s54
      %p58 = scmp.eq.s32.totalorder %s18, 0
      %p59 = por %p57, %p58
      %p60 = scmp.ne.s32.totalorder %s52, %s54
      %p61 = scmp.eq.s32.totalorder %s23, 1
      %p62 = por %p60, %p61
      %p63 = scmp.ne.s32.totalorder %s54, %s55
      %p64 = scmp.eq.s32.totalorder %s23, 0
      %p65 = por %p63, %p64
      %p66 = scmp.ne.s32.totalorder %s54, %s55
      %p67 = scmp.eq.s32.totalorder %s24, 1
      %p68 = por %p66, %p67
      %p70 = scmp.ne.s32.totalorder %s55, %s69
      %p71 = scmp.eq.s32.totalorder %s24, 0
      %p72 = por %p70, %p71
      %s74 = sadd.s32 %s73, 1
      %p77 = scmp.eq.s32.totalorder %s18, 1
      %p78 = scmp.ne.s32.totalorder %s73, %s75
      %p79 = scmp.eq.s32.totalorder %s18, 0
      %p80 = por %p78, %p79
      %p81 = scmp.ne.s32.totalorder %s73, %s75
      %p82 = scmp.eq.s32.totalorder %s23, 1
      %p83 = por %p81, %p82
      %p84 = scmp.ne.s32.totalorder %s75, %s76
      %p85 = scmp.eq.s32.totalorder %s23, 0
      %p86 = por %p84, %p85
      %p87 = scmp.ne.s32.totalorder %s75, %s76
      %p88 = scmp.eq.s32.totalorder %s24, 1
      %p89 = por %p87, %p88
      %p91 = scmp.ne.s32.totalorder %s76, %s90
      %p92 = scmp.eq.s32.totalorder %s24, 0
      %p93 = por %p91, %p92
      %s95 = sadd.s32 %s94, 1
      %p98 = scmp.eq.s32.totalorder %s18, 1
      %p99 = scmp.ne.s32.totalorder %s94, %s96
      %p100 = scmp.eq.s32.totalorder %s18, 0
      %p101 = por %p99, %p100
      %p102 = scmp.ne.s32.totalorder %s94, %s96
      %p103 = scmp.eq.s32.totalorder %s23, 1
      %p104 = por %p102, %p103
      %p105 = scmp.ne.s32.totalorder %s96, %s97
      %p106 = scmp.eq.s32.totalorder %s23, 0
      %p107 = por %p105, %p106
      %p108 = scmp.ne.s32.totalorder %s96, %s97
      %p109 = scmp.eq.s32.totalorder %s24, 1
      %p110 = por %p108, %p109
      %p112 = scmp.ne.s32.totalorder %s97, %s111
      %p113 = scmp.eq.s32.totalorder %s24, 0
      %p114 = por %p112, %p113
      %s116 = sadd.s32 %s115, 1
      %p119 = scmp.eq.s32.totalorder %s18, 1
      %p120 = scmp.ne.s32.totalorder %s115, %s117
      %p121 = scmp.eq.s32.totalorder %s18, 0
      %p122 = por %p120, %p121
      %p123 = scmp.ne.s32.totalorder %s115, %s117
      %p124 = scmp.eq.s32.totalorder %s23, 1
      %p125 = por %p123, %p124
      %p126 = scmp.ne.s32.totalorder %s117, %s118
      %p127 = scmp.eq.s32.totalorder %s23, 0
      %p128 = por %p126, %p127
      %p129 = scmp.ne.s32.totalorder %s117, %s118
      %p130 = scmp.eq.s32.totalorder %s24, 1
      %p131 = por %p129, %p130
      %p133 = scmp.ne.s32.totalorder %s118, %s132
      %p134 = scmp.eq.s32.totalorder %s24, 0
      %p135 = por %p133, %p134
      %s136 = ssub.s32 %s18, %s25
      %p137 = scmp.eq.s32.totalorder %s136, 0
      %s139 = sadd.s32 %s138, 1
      %s140 = scalar_select %p137, %s138, %s139
      %p143 = pneg %p137
      %p144 = scmp.eq.s32.totalorder %s18, 1
      %p145 = por %p143, %p144
      %p146 = scmp.ne.s32.totalorder %s138, %s141
      %p147 = scmp.eq.s32.totalorder %s18, 0
      %p148 = por %p146, %p147
      %p149 = scmp.ne.s32.totalorder %s138, %s141
      %p150 = scmp.eq.s32.totalorder %s23, 1
      %p151 = por %p149, %p150
      %p152 = scmp.ne.s32.totalorder %s141, %s142
      %p153 = scmp.eq.s32.totalorder %s23, 0
      %p154 = por %p152, %p153
      %p155 = scmp.ne.s32.totalorder %s141, %s142
      %p156 = scmp.eq.s32.totalorder %s24, 1
      %p157 = por %p155, %p156
      %p159 = scmp.ne.s32.totalorder %s142, %s158
      %p160 = scmp.eq.s32.totalorder %s24, 0
      %p161 = por %p159, %p160
      %p162 = scmp.le.s32.totalorder 1, %s18
      %p163 = scmp.lt.s32.totalorder %s18, 3
      %p164 = pnand %p162, %p163
      %p165 = pneg %p164
      // Predicated region
      $region9: #{tpu_custom_call.1} parent=5 // pred_check
        _
      $region10: #{tpu_custom_call.1} parent=5 // pred_check_branch
        %167 = sbr.rel (%p164) target = $region12
      $region11: #{tpu_custom_call.1} parent=5 // pred_region
        %s168 = ssub.s32 %s18, 1
        // Predicated region
        $region13: #{tpu_custom_call.1} parent=11 // pred_check
          %p169 = pneg %p65
        $region14: #{tpu_custom_call.1} parent=11 // pred_check_branch
          %171 = sbr.rel (%p169) target = $region16
        $region15: #{tpu_custom_call.1} parent=11 // pred_region
          %s173 = ssub.s32 512, 512
          %174 = vsyncadd [#allocation6], %s173
          %s175 = sshll.u32 [#allocation5], 4
          %s176 = int_to_ptr.vmem [resolvable:$true] %s175
          %181 = dma.hbm_to_vmem [thread:$0]  %s1, 512, %s176, [#allocation6], 128, 128, 8
        $region16: #{tpu_custom_call.1} parent=11 // pred_fallthru
          _
        // Predicated region
        $region17: #{tpu_custom_call.1} parent=11 // pred_check
          %p182 = pneg %p86
        $region18: #{tpu_custom_call.1} parent=11 // pred_check_branch
          %184 = sbr.rel (%p182) target = $region20
        $region19: #{tpu_custom_call.1} parent=11 // pred_region
          _
        $region20: #{tpu_custom_call.1} parent=11 // pred_fallthru
          _
        // Predicated region
        $region21: #{tpu_custom_call.1} parent=11 // pred_check
          %p185 = pneg %p107
        $region22: #{tpu_custom_call.1} parent=11 // pred_check_branch
          %187 = sbr.rel (%p185) target = $region24
        $region23: #{tpu_custom_call.1} parent=11 // pred_region
          %s189 = ssub.s32 2048, 2048
          %190 = vsyncadd [#allocation6], %s189
          %s191 = sshll.u32 [#allocation7], 4
          %s192 = int_to_ptr.vmem [resolvable:$true] %s191
          %197 = dma.hbm_to_vmem [thread:$0]  %s3, 2048, %s192, [#allocation6], 128, 128, 8
        $region24: #{tpu_custom_call.1} parent=11 // pred_fallthru
          _
        // Predicated region
        $region25: #{tpu_custom_call.1} parent=11 // pred_check
          %p198 = pneg %p128
        $region26: #{tpu_custom_call.1} parent=11 // pred_check_branch
          %200 = sbr.rel (%p198) target = $region28
        $region27: #{tpu_custom_call.1} parent=11 // pred_region
          _
        $region28: #{tpu_custom_call.1} parent=11 // pred_fallthru
          _
      $region12: #{tpu_custom_call.1} parent=5 // pred_fallthru
        _
      %p201 = scmp.lt.s32.totalorder %s18, 2
      // Predicated region
      $region29: #{tpu_custom_call.1} parent=5 // pred_check
        %p202 = pneg %p201
      $region30: #{tpu_custom_call.1} parent=5 // pred_check_branch
        %204 = sbr.rel (%p202) target = $region32
      $region31: #{tpu_custom_call.1} parent=5 // pred_region
        // Predicated region
        $region33: #{tpu_custom_call.1} parent=31 // pred_check
          %p205 = pneg %p38
        $region34: #{tpu_custom_call.1} parent=31 // pred_check_branch
          %207 = sbr.rel (%p205) target = $region36
        $region35: #{tpu_custom_call.1} parent=31 // pred_region
          %s208 = sand.u32 %s28, 1
          %s209 = scalar_lea.sflag [#allocation3], %s208
          %s210 = sand.u32 %s28, 1
          %s211 = smul.addr %s210, 8
          %s212 = scalar_lea.vmem [#allocation2], %s211
          %s214 = ssub.s32 128, 128
          %215 = vsyncadd %s209, %s214
          %s216 = smul.addr %s18, 128
          %s217 = scalar_lea.hbm %s0, %s216
          %s219 = sshll.u32 %s212, 4
          %s220 = int_to_ptr.vmem [resolvable:$true] %s219
          %222 = dma.hbm_to_vmem [thread:$0]  %s217, 128, %s220, %s209
        $region36: #{tpu_custom_call.1} parent=31 // pred_fallthru
          _
      $region32: #{tpu_custom_call.1} parent=5 // pred_fallthru
        _
      %p223 = scmp.le.s32.totalorder 1, %s18
      %p224 = scmp.lt.s32.totalorder %s18, 3
      %p225 = pnand %p223, %p224
      %p226 = pneg %p225
      // Predicated region
      $region37: #{tpu_custom_call.1} parent=5 // pred_check
        _
      $region38: #{tpu_custom_call.1} parent=5 // pred_check_branch
        %228 = sbr.rel (%p225) target = $region40
      $region39: #{tpu_custom_call.1} parent=5 // pred_region
        %s229 = ssub.s32 %s18, 1
        %s230 = sand.u32 %s31, 1
        %s231 = scalar_lea.sflag [#allocation3], %s230
        %s232 = sand.u32 %s31, 1
        %s233 = smul.addr %s232, 8
        %s234 = scalar_lea.vmem [#allocation2], %s233
        // Predicated region
        $region41: #{tpu_custom_call.1} parent=39 // pred_check
          %p235 = pneg %p44
        $region42: #{tpu_custom_call.1} parent=39 // pred_check_branch
          %237 = sbr.rel (%p235) target = $region44
        $region43: #{tpu_custom_call.1} parent=39 // pred_region
          %238 = dma.done %s231, 128
        $region44: #{tpu_custom_call.1} parent=39 // pred_fallthru
          _
        // Predicated region
        $region45: #{tpu_custom_call.1} parent=39 // pred_check
          %p239 = pneg %p65
        $region46: #{tpu_custom_call.1} parent=39 // pred_check_branch
          %241 = sbr.rel (%p239) target = $region48
        $region47: #{tpu_custom_call.1} parent=39 // pred_region
          %242 = dma.done [#allocation6], 512
        $region48: #{tpu_custom_call.1} parent=39 // pred_fallthru
          _
        // Predicated region
        $region49: #{tpu_custom_call.1} parent=39 // pred_check
          %p243 = pneg %p107
        $region50: #{tpu_custom_call.1} parent=39 // pred_check_branch
          %245 = sbr.rel (%p243) target = $region52
        $region51: #{tpu_custom_call.1} parent=39 // pred_region
          %246 = dma.done [#allocation6], 2048
        $region52: #{tpu_custom_call.1} parent=39 // pred_fallthru
          _
        %s247 = sand.u32 %s31, 1
        %s248 = scalar_lea.sflag [#allocation3], %s247
        %s249 = sand.u32 %s31, 1
        %s250 = smul.addr %s249, 8
        %s251 = scalar_lea.vmem [#allocation2], %s250
        %p252 = pneg %p44
        %p253 = pneg %p41
        %p254 = pneg %p65
        %p255 = pneg %p62
        %p256 = pneg %p86
        %p257 = pneg %p83
        %p258 = pneg %p107
        %p259 = pneg %p104
        %p260 = pneg %p128
        %p261 = pneg %p125
        %p262 = pneg %p154
        %p263 = pneg %p151
        %s264 = sand.u32 %s141, 1
        %s265 = scalar_lea.sflag [#allocation4], %s264
        %s266 = sand.u32 %s141, 1
        %s267 = smul.addr %s266, 8
        %s268 = scalar_lea.vmem [#allocation8], %s267
        %v269 = vld [vmem:[#allocation5] sm:$0xff]
        %v270 = vld [vmem:[#allocation5 + $0x8] sm:$0xff]
        %v271 = vld [vmem:[#allocation5 + $0x10] sm:$0xff]
        %v272 = vld [vmem:[#allocation5 + $0x18] sm:$0xff]
        %v273 = vld [vmem:[#allocation7] sm:$0xff]
        %v274 = vld [vmem:[#allocation7 + $0x8] sm:$0xff]
        %v275 = vld [vmem:[#allocation7 + $0x10] sm:$0xff]
        %v276 = vld [vmem:[#allocation7 + $0x18] sm:$0xff]
        %v277 = vld [vmem:[#allocation7 + $0x20] sm:$0xff]
        %v278 = vld [vmem:[#allocation7 + $0x28] sm:$0xff]
        %v279 = vld [vmem:[#allocation7 + $0x30] sm:$0xff]
        %v280 = vld [vmem:[#allocation7 + $0x38] sm:$0xff]
        %v281 = vld [vmem:[#allocation7 + $0x40] sm:$0xff]
        %v282 = vld [vmem:[#allocation7 + $0x48] sm:$0xff]
        %v283 = vld [vmem:[#allocation7 + $0x50] sm:$0xff]
        %v284 = vld [vmem:[#allocation7 + $0x58] sm:$0xff]
        %v285 = vld [vmem:[#allocation7 + $0x60] sm:$0xff]
        %v286 = vld [vmem:[#allocation7 + $0x68] sm:$0xff]
        %v287 = vld [vmem:[#allocation7 + $0x70] sm:$0xff]
        %v288 = vld [vmem:[#allocation7 + $0x78] sm:$0xff]
        %v289 = vld [vmem:[%s2] sm:$0x1]
        %v290 = vld [vmem:[%s4] sm:$0x1]
        %v291 = vld [vmem:[%s234] sm:$0xff]
        %v293 = vlaneseq
        %v294 = vshrl.u32 %v293, 7
        %v295 = vsub.s32 0, %v294
        %v296 = vrot.slane %v289, %v295
        %vm298 = vcmask 261120
        %v300 = vsel %vm298, %v291, 0
        %302 = vmatprep.subr.mxu0 0.0
        %303 = vmatpush1.msra.mxu0 0.0
        %304 = vmatprep.subr.mxu0 0.0
        %305 = vmatpush1.msra.mxu0 0.0
        %306 = vmatprep.subr.mxu0 0.0
        %307 = vmatpush1.msra.mxu0 0.0
        %308 = vmatprep.subr.mxu0 0.0
        %309 = vmatpush1.msra.mxu0 0.0
        %310 = vmatprep.subr.mxu0 0.0
        %311 = vmatpush1.msra.mxu0 0.0
        %312 = vmatprep.subr.mxu0 0.0
        %313 = vmatpush1.msra.mxu0 0.0
        %314 = vmatprep.subr.mxu0 0.0
        %315 = vmatpush1.msra.mxu0 0.0
        %316 = vmatprep.subr.mxu0 0.0
        %317 = vmatpush1.msra.mxu0 0.0
        %318 = vmatprep.subr.mxu0 0.0
        %319 = vmatpush1.msra.mxu0 0.0
        %320 = vmatprep.subr.mxu0 0.0
        %321 = vmatpush1.msra.mxu0 0.0
        %322 = vmatprep.subr.mxu0 0.0
        %323 = vmatpush1.msra.mxu0 0.0
        %324 = vmatprep.subr.mxu0 0.0
        %325 = vmatpush1.msra.mxu0 0.0
        %326 = vmatprep.subr.mxu0 0.0
        %327 = vmatpush1.msra.mxu0 %v272
        %328 = vmatprep.subr.mxu0 0.0
        %329 = vmatpush1.msra.mxu0 %v271
        %330 = vmatprep.subr.mxu0 0.0
        %331 = vmatpush1.msra.mxu0 %v270
        %332 = vmatprep.subr.mxu0 0.0
        %333 = vmatpush1.msra.mxu0 %v269
        %334 = vmatprep.subr.mxu0 0.0
        %335 = vmatpush2.msra.mxu0 0.0
        %336 = vmatprep.subr.mxu0 0.0
        %337 = vmatpush2.msra.mxu0 0.0
        %338 = vmatprep.subr.mxu0 0.0
        %339 = vmatpush2.msra.mxu0 0.0
        %340 = vmatprep.subr.mxu0 0.0
        %341 = vmatpush2.msra.mxu0 0.0
        %342 = vmatprep.subr.mxu0 0.0
        %343 = vmatpush2.msra.mxu0 0.0
        %344 = vmatprep.subr.mxu0 0.0
        %345 = vmatpush2.msra.mxu0 0.0
        %346 = vmatprep.subr.mxu0 0.0
        %347 = vmatpush2.msra.mxu0 0.0
        %348 = vmatprep.subr.mxu0 0.0
        %349 = vmatpush2.msra.mxu0 0.0
        %350 = vmatprep.subr.mxu0 0.0
        %351 = vmatpush2.msra.mxu0 0.0
        %352 = vmatprep.subr.mxu0 0.0
        %353 = vmatpush2.msra.mxu0 0.0
        %354 = vmatprep.subr.mxu0 0.0
        %355 = vmatpush2.msra.mxu0 0.0
        %356 = vmatprep.subr.mxu0 0.0
        %357 = vmatpush2.msra.mxu0 0.0
        %358 = vmatprep.subr.mxu0 0.0
        %359 = vmatpush2.msra.mxu0 0.0
        %360 = vmatprep.subr.mxu0 0.0
        %361 = vmatpush2.msra.mxu0 0.0
        %362 = vmatprep.subr.mxu0 0.0
        %363 = vmatpush2.msra.mxu0 0.0
        %364 = vmatprep.subr.mxu0 0.0
        %365 = vmatpush2.msra.mxu0 0.0
        %366 = vmatprep.mubr.f32.mxu0 0.0
        %367 = vmatmul.mubr.f32.gmra.mxu0 %v300
        %v368 = vpop.f32.mrf.mxu0
        %v369 = vadd.f32 %v296, %v368
        %v370 = vpop.f32.mrf.mxu0
        %371 = vdwg.mxu0
        %v372 = vtanh.pop %v369
        %v374 = vlaneseq
        %v375 = vshrl.u32 %v374, 7
        %v376 = vsub.s32 0, %v375
        %v377 = vrot.slane %v290, %v376
        %379 = vmatprep.subr.mxu0 0.0
        %380 = vmatpush1.msra.mxu0 %v288
        %381 = vmatprep.subr.mxu0 0.0
        %382 = vmatpush1.msra.mxu0 %v287
        %383 = vmatprep.subr.mxu0 0.0
        %384 = vmatpush1.msra.mxu0 %v286
        %385 = vmatprep.subr.mxu0 0.0
        %386 = vmatpush1.msra.mxu0 %v285
        %387 = vmatprep.subr.mxu0 0.0
        %388 = vmatpush1.msra.mxu0 %v284
        %389 = vmatprep.subr.mxu0 0.0
        %390 = vmatpush1.msra.mxu0 %v283
        %391 = vmatprep.subr.mxu0 0.0
        %392 = vmatpush1.msra.mxu0 %v282
        %393 = vmatprep.subr.mxu0 0.0
        %394 = vmatpush1.msra.mxu0 %v281
        %395 = vmatprep.subr.mxu0 0.0
        %396 = vmatpush1.msra.mxu0 %v280
        %397 = vmatprep.subr.mxu0 0.0
        %398 = vmatpush1.msra.mxu0 %v279
        %399 = vmatprep.subr.mxu0 0.0
        %400 = vmatpush1.msra.mxu0 %v278
        %401 = vmatprep.subr.mxu0 0.0
        %402 = vmatpush1.msra.mxu0 %v277
        %403 = vmatprep.subr.mxu0 0.0
        %404 = vmatpush1.msra.mxu0 %v276
        %405 = vmatprep.subr.mxu0 0.0
        %406 = vmatpush1.msra.mxu0 %v275
        %407 = vmatprep.subr.mxu0 0.0
        %408 = vmatpush1.msra.mxu0 %v274
        %409 = vmatprep.subr.mxu0 0.0
        %410 = vmatpush1.msra.mxu0 %v273
        %411 = vmatprep.subr.mxu0 0.0
        %412 = vmatpush2.msra.mxu0 0.0
        %413 = vmatprep.subr.mxu0 0.0
        %414 = vmatpush2.msra.mxu0 0.0
        %415 = vmatprep.subr.mxu0 0.0
        %416 = vmatpush2.msra.mxu0 0.0
        %417 = vmatprep.subr.mxu0 0.0
        %418 = vmatpush2.msra.mxu0 0.0
        %419 = vmatprep.subr.mxu0 0.0
        %420 = vmatpush2.msra.mxu0 0.0
        %421 = vmatprep.subr.mxu0 0.0
        %422 = vmatpush2.msra.mxu0 0.0
        %423 = vmatprep.subr.mxu0 0.0
        %424 = vmatpush2.msra.mxu0 0.0
        %425 = vmatprep.subr.mxu0 0.0
        %426 = vmatpush2.msra.mxu0 0.0
        %427 = vmatprep.subr.mxu0 0.0
        %428 = vmatpush2.msra.mxu0 0.0
        %429 = vmatprep.subr.mxu0 0.0
        %430 = vmatpush2.msra.mxu0 0.0
        %431 = vmatprep.subr.mxu0 0.0
        %432 = vmatpush2.msra.mxu0 0.0
        %433 = vmatprep.subr.mxu0 0.0
        %434 = vmatpush2.msra.mxu0 0.0
        %435 = vmatprep.subr.mxu0 0.0
        %436 = vmatpush2.msra.mxu0 0.0
        %437 = vmatprep.subr.mxu0 0.0
        %438 = vmatpush2.msra.mxu0 0.0
        %439 = vmatprep.subr.mxu0 0.0
        %440 = vmatpush2.msra.mxu0 0.0
        %441 = vmatprep.subr.mxu0 0.0
        %442 = vmatpush2.msra.mxu0 0.0
        %443 = vmatprep.mubr.f32.mxu0 0.0
        %444 = vmatmul.mubr.f32.gmra.mxu0 %v372
        %v445 = vpop.f32.mrf.mxu0
        %v446 = vadd.f32 %v377, %v445
        %v447 = vpop.f32.mrf.mxu0
        %448 = vdwg.mxu0
        %449 = vst [vmem:[%s268] sm:$0xff] %v446
        %s450 = sand.u32 %s141, 1
        %s451 = scalar_lea.sflag [#allocation4], %s450
        %s452 = sand.u32 %s141, 1
        %s453 = smul.addr %s452, 8
        %s454 = scalar_lea.vmem [#allocation8], %s453
        // Predicated region
        $region53: #{tpu_custom_call.1} parent=39 // pred_check
          %p455 = pneg %p151
        $region54: #{tpu_custom_call.1} parent=39 // pred_check_branch
          %457 = sbr.rel (%p455) target = $region56
        $region55: #{tpu_custom_call.1} parent=39 // pred_region
          %s459 = ssub.s32 128, 128
          %460 = vsyncadd %s451, %s459
          %s461 = smul.addr %s23, 128
          %s462 = scalar_lea.hbm %s5, %s461
          %s464 = sshll.u32 %s454, 4
          %s465 = int_to_ptr.vmem [resolvable:$true] %s464
          %467 = dma.vmem_to_hbm [thread:$0]  %s465, 128, %s462, %s451
        $region56: #{tpu_custom_call.1} parent=39 // pred_fallthru
          _
      $region40: #{tpu_custom_call.1} parent=5 // pred_fallthru
        _
      %p468 = scmp.le.s32.totalorder 2, %s18
      // Predicated region
      $region57: #{tpu_custom_call.1} parent=5 // pred_check
        %p469 = pneg %p468
      $region58: #{tpu_custom_call.1} parent=5 // pred_check_branch
        %471 = sbr.rel (%p469) target = $region60
      $region59: #{tpu_custom_call.1} parent=5 // pred_region
        %s472 = ssub.s32 %s18, 2
        // Predicated region
        $region61: #{tpu_custom_call.1} parent=59 // pred_check
          %p473 = pneg %p157
        $region62: #{tpu_custom_call.1} parent=59 // pred_check_branch
          %475 = sbr.rel (%p473) target = $region64
        $region63: #{tpu_custom_call.1} parent=59 // pred_region
          %s476 = sand.u32 %s142, 1
          %s477 = scalar_lea.sflag [#allocation4], %s476
          %s478 = sand.u32 %s142, 1
          %s479 = smul.addr %s478, 8
          %s480 = scalar_lea.vmem [#allocation8], %s479
          %481 = dma.done %s477, 128
        $region64: #{tpu_custom_call.1} parent=59 // pred_fallthru
          _
      $region60: #{tpu_custom_call.1} parent=5 // pred_fallthru
        _
    $region6: #{tpu_custom_call.1} parent=1 // loop_footer
      %s22 = sadd.s32 1, %s18
    $region7: #{tpu_custom_call.1} parent=1 // loop_footer_branch
      %17 = sbr.rel target = $region3
    $region8: #{tpu_custom_call.1} parent=1 // loop_exit
      _
    %482 = vsyncpa [#allocation3], 1
    %s483 = scalar_lea.sflag [#allocation3], 1
    %484 = vsyncpa %s483, 1
    %485 = vsyncpa [#allocation6], 1
    %486 = vsyncpa [#allocation4], 1
    %s487 = scalar_lea.sflag [#allocation4], 1
    %488 = vsyncpa %s487, 1

</llo_original>
